<compile_context>
chip_gen: v6e
topology: v6e:2x2x1
jax: 0.10.0
libtpu: 0.0.40
codegen_flags: <defaults>
</compile_context>

<pallas_src>
import jax
import jax.numpy as jnp
from jax.experimental import pallas as pl
from jax.experimental.pallas import tpu as pltpu


def _round_up(x, m):
    return ((x + m - 1) // m) * m


def _pad_cast(a, shape, dtype):
    """Cast to `dtype` then zero-pad to `shape`. No-op (no copy beyond the
    cast, and no cast if dtype already matches) when `a` is already padded."""
    a = jnp.asarray(a).astype(dtype)
    if a.shape == tuple(shape):
        return a
    return jnp.pad(a, [(0, s - d) for s, d in zip(shape, a.shape)])


def _head_kernel(x_ref, w1_ref, b1_ref, w2_ref, b2_ref, o_ref):
    # x: [TB, Hp]  w1: [Hp, Hp]  b1: [1, Hp]  w2: [Hp, Lp]  b2: [1, Lp]  o: [TB, Lp]
    x = x_ref[...]
    # dense: MXU matmul with f32 accumulation; bias add + tanh in f32 (VPU/EUP).
    h = jnp.dot(x, w1_ref[...], preferred_element_type=jnp.float32)
    h = jnp.tanh(h + b1_ref[...])
    # out_proj. astype() downcasts tanh activations to the MXU dtype (bf16 by
    # default); accumulation stays f32, bias add in f32.
    o = jnp.dot(h.astype(w2_ref.dtype), w2_ref[...],
                preferred_element_type=jnp.float32)
    o_ref[...] = (o + b2_ref[...]).astype(o_ref.dtype)


def prepare_head_params(w_dense, b_dense, w_out, b_out, *, mxu_dtype=jnp.bfloat16):
    """One-time (model-load-time) pad/cast of the head parameters.

    Returns (w1, b1, w2, b2) already padded to (Hp, Hp), (1, Hp), (Hp, Lp),
    (1, Lp). Pass these to `hubert_classification_head` together with
    `num_labels=` to avoid any per-call weight copies."""
    H = w_dense.shape[0]
    L = w_out.shape[1]
    Hp = _round_up(H, 128)
    Lp = _round_up(max(L, 128), 128)
    w1 = _pad_cast(w_dense, (Hp, Hp), mxu_dtype)
    b1 = _pad_cast(jnp.asarray(b_dense).reshape(1, -1), (1, Hp), jnp.float32)
    w2 = _pad_cast(w_out, (Hp, Lp), mxu_dtype)
    b2 = _pad_cast(jnp.asarray(b_out).reshape(1, -1), (1, Lp), jnp.float32)
    return w1, b1, w2, b2


def hubert_classification_head(features, w_dense, b_dense, w_out, b_out, *,
                               num_labels=None, block_b=512,
                               mxu_dtype=jnp.bfloat16):
    """HubertClassificationHead forward (eval mode: dropout = identity).

    features: [B, H]; w_dense: [H, H] (or pre-padded [Hp, Hp]); b_dense: [H];
    w_out: [H, L] (or pre-padded [Hp, Lp]); b_out: [L].
    Weights are in [in, out] layout (i.e. PyTorch weight.T).
    num_labels: required when passing pre-padded weights (from
      prepare_head_params); otherwise inferred from w_out.
    mxu_dtype: dtype for the MXU operands (x, W1, W2). Default bf16 on all
      TPU generations; biases / bias-add / tanh stay in f32. Do NOT use int8
      on v7x (its MXU has no int support).
    """
    B, H = features.shape
    L = num_labels if num_labels is not None else w_out.shape[1]
    out_dtype = features.dtype
    mxu_dtype = jnp.dtype(mxu_dtype)

    # Contraction dim padded to a multiple of 128 (full MXU passes / vregs).
    Hp = _round_up(H, 128)
    # Lane-dense output: pad num_labels to a 128-lane multiple.
    Lp = _round_up(max(L, 128), 128)

    # Sublane packing of the MXU dtype (bf16 packs 2 rows per vreg sublane).
    packing = max(1, 4 // mxu_dtype.itemsize)
    align = 8 * packing
    # Aim for >=4 grid steps (>=2 keeps both v7x TensorCores fed; 4 bounds
    # batch-padding waste to ~B/4 worst case) while keeping TB <= block_b.
    n_target_tiles = 4
    TB = max(align, min(block_b, _round_up(-(-B // n_target_tiles), align)))
    Bp = _round_up(B, TB)

    f32 = jnp.float32
    # No-ops when shapes already aligned (H=768/1024, B % TB == 0) and dtypes
    # already match (e.g. weights pre-cast/padded via prepare_head_params).
    x_p = _pad_cast(features, (Bp, Hp), mxu_dtype)
    w1_p = _pad_cast(w_dense, (Hp, Hp), mxu_dtype)
    b1_p = _pad_cast(jnp.asarray(b_dense).reshape(1, -1), (1, Hp), f32)
    w2_p = _pad_cast(w_out, (Hp, Lp), mxu_dtype)
    b2_p = _pad_cast(jnp.asarray(b_out).reshape(1, -1), (1, Lp), f32)

    grid = (Bp // TB,)

    def _nbytes(a):
        return a.size * a.dtype.itemsize

    cost = pl.CostEstimate(
        flops=2 * Bp * Hp * (Hp + Lp),
        transcendentals=Bp * Hp,
        bytes_accessed=(_nbytes(x_p) + _nbytes(w1_p) + _nbytes(b1_p)
                        + _nbytes(w2_p) + _nbytes(b2_p)
                        + Bp * Lp * jnp.dtype(out_dtype).itemsize),
    )

    # Grid-invariant operands: constant index_map + single buffer (no benefit
    # from double-buffering, halves resident weight VMEM -> fits v5e's 16 MiB
    # scoped default even for large hidden sizes).
    resident = pl.Buffered(1)

    out_p = pl.pallas_call(
        _head_kernel,
        out_shape=jax.ShapeDtypeStruct((Bp, Lp), out_dtype),
        grid=grid,
        in_specs=[
            pl.BlockSpec((TB, Hp), lambda i: (i, 0)),                           # x tile (pipelined)
            pl.BlockSpec((Hp, Hp), lambda i: (0, 0), pipeline_mode=resident),   # W1 (resident)
            pl.BlockSpec((1, Hp), lambda i: (0, 0), pipeline_mode=resident),    # b1 (resident)
            pl.BlockSpec((Hp, Lp), lambda i: (0, 0), pipeline_mode=resident),   # W2 (resident)
            pl.BlockSpec((1, Lp), lambda i: (0, 0), pipeline_mode=resident),    # b2 (resident)
        ],
        out_specs=pl.BlockSpec((TB, Lp), lambda i: (i, 0)),
        compiler_params=pltpu.CompilerParams(
            dimension_semantics=("parallel",)),
        cost_estimate=cost,
    )(x_p, w1_p, b1_p, w2_p, b2_p)

    # Slice away batch padding and zero-padded logit columns so padded zero
    # logits can never be selected by a downstream softmax/argmax.
    return out_p[:B, :L]


if __name__ == "__main__":
    # Small, module-consistent shapes: pooled features [batch, hidden_size].
    batch = 8
    hidden_size = 32
    num_labels = 8  # len(label_list)

    key = jax.random.PRNGKey(0)
    k_x, k_w1, k_b1, k_w2, k_b2 = jax.random.split(key, 5)

    # Deterministic synthetic parameters (PyTorch Linear-like scale 1/sqrt(in)).
    scale = 1.0 / jnp.sqrt(jnp.float32(hidden_size))
    features = jax.random.normal(k_x, (batch, hidden_size), jnp.float32)
    # Stored directly in [in, out] layout (== PyTorch weight.T).
    w_dense = jax.random.uniform(k_w1, (hidden_size, hidden_size), jnp.float32,
                                 -scale, scale)
    b_dense = jax.random.uniform(k_b1, (hidden_size,), jnp.float32, -scale, scale)
    w_out = jax.random.uniform(k_w2, (hidden_size, num_labels), jnp.float32,
                               -scale, scale)
    b_out = jax.random.uniform(k_b2, (num_labels,), jnp.float32, -scale, scale)

    # Pure-JAX reference (dropout = identity in eval mode).
    ref = jnp.tanh(features @ w_dense + b_dense[None, :]) @ w_out + b_out[None, :]

    # 1) f32 MXU operands: exact-path check at tight tolerance.
    out_f32 = hubert_classification_head(features, w_dense, b_dense, w_out, b_out,
                                         mxu_dtype=jnp.float32)
    out_f32 = jax.block_until_ready(out_f32)
    assert out_f32.shape == (batch, num_labels)
    assert jnp.allclose(out_f32, ref, atol=1e-5, rtol=1e-5), "f32 mismatch vs reference"

    # 2) Default bf16 MXU operands, with weights pre-padded/cast once at
    #    "model load" time (zero per-call weight copies). bf16 operand rounding
    #    -> looser tolerance vs the pure-f32 reference.
    w1p, b1p, w2p, b2p = prepare_head_params(w_dense, b_dense, w_out, b_out)
    out_bf16 = hubert_classification_head(features, w1p, b1p, w2p, b2p,
                                          num_labels=num_labels)
    out_bf16 = jax.block_until_ready(out_bf16)
    assert out_bf16.shape == (batch, num_labels)
    assert jnp.allclose(out_bf16, ref, atol=2e-2, rtol=2e-2), "bf16 mismatch vs reference"

    print("KERNEL_OK")
</pallas_src>

<mosaic_0001>
module attributes {stable_mosaic.version = 11 : i64} {
  func.func @_head_kernel(%arg0: i32, %arg1: memref<8x128xf32, #tpu.memory_space<vmem>>, %arg2: memref<128x128xf32, #tpu.memory_space<vmem>>, %arg3: memref<1x128xf32, #tpu.memory_space<vmem>>, %arg4: memref<128x128xf32, #tpu.memory_space<vmem>>, %arg5: memref<1x128xf32, #tpu.memory_space<vmem>>, %arg6: memref<8x128xf32, #tpu.memory_space<vmem>>) attributes {dimension_semantics = [#tpu.dimension_semantics<parallel>], iteration_bounds = array<i64: 1>, scalar_prefetch = 0 : i64, scratch_operands = 0 : i64, tpu.core_type = #tpu.core_type<tc>, window_params = [{transform_indices = @transform_0, window_bounds = array<i64: 8, 128>}, {pipeline_mode = #tpu.pipeline_mode<synchronous>, transform_indices = @transform_1, window_bounds = array<i64: 128, 128>}, {pipeline_mode = #tpu.pipeline_mode<synchronous>, transform_indices = @transform_2, window_bounds = array<i64: 1, 128>}, {pipeline_mode = #tpu.pipeline_mode<synchronous>, transform_indices = @transform_3, window_bounds = array<i64: 128, 128>}, {pipeline_mode = #tpu.pipeline_mode<synchronous>, transform_indices = @transform_4, window_bounds = array<i64: 1, 128>}, {transform_indices = @transform_5, window_bounds = array<i64: 8, 128>}]} {
    %c0 = arith.constant 0 : index
    %c0_0 = arith.constant 0 : index
    %0 = vector.load %arg1[%c0, %c0_0] : memref<8x128xf32, #tpu.memory_space<vmem>>, vector<8x128xf32>
    %c0_1 = arith.constant 0 : index
    %c0_2 = arith.constant 0 : index
    %1 = vector.load %arg2[%c0_1, %c0_2] : memref<128x128xf32, #tpu.memory_space<vmem>>, vector<128x128xf32>
    %cst = arith.constant dense<0.000000e+00> : vector<8x128xf32>
    %2 = tpu.matmul %0, %1, %cst {dimension_numbers = #tpu.dot_dimension_numbers<[1], [0], [0], [1], [0, 0, 1, 1], [], []>} : vector<8x128xf32>, vector<128x128xf32>, vector<8x128xf32> -> vector<8x128xf32>
    %c0_3 = arith.constant 0 : index
    %c0_4 = arith.constant 0 : index
    %3 = vector.load %arg3[%c0_3, %c0_4] : memref<1x128xf32, #tpu.memory_space<vmem>>, vector<1x128xf32>
    %4 = vector.broadcast %3 : vector<1x128xf32> to vector<8x128xf32>
    %5 = arith.addf %2, %4 : vector<8x128xf32>
    %6 = math.tanh %5 : vector<8x128xf32>
    %c0_5 = arith.constant 0 : index
    %c0_6 = arith.constant 0 : index
    %7 = vector.load %arg4[%c0_5, %c0_6] : memref<128x128xf32, #tpu.memory_space<vmem>>, vector<128x128xf32>
    %cst_7 = arith.constant dense<0.000000e+00> : vector<8x128xf32>
    %8 = tpu.matmul %6, %7, %cst_7 {dimension_numbers = #tpu.dot_dimension_numbers<[1], [0], [0], [1], [0, 0, 1, 1], [], []>} : vector<8x128xf32>, vector<128x128xf32>, vector<8x128xf32> -> vector<8x128xf32>
    %c0_8 = arith.constant 0 : index
    %c0_9 = arith.constant 0 : index
    %9 = vector.load %arg5[%c0_8, %c0_9] : memref<1x128xf32, #tpu.memory_space<vmem>>, vector<1x128xf32>
    %10 = vector.broadcast %9 : vector<1x128xf32> to vector<8x128xf32>
    %11 = arith.addf %8, %10 : vector<8x128xf32>
    %c0_10 = arith.constant 0 : index
    %c0_11 = arith.constant 0 : index
    %12 = vector.load %arg6[%c0_10, %c0_11] : memref<8x128xf32, #tpu.memory_space<vmem>>, vector<8x128xf32>
    tpu.vector_store %arg6[%c0_10, %c0_11], %11 {strides = array<i32>} : memref<8x128xf32, #tpu.memory_space<vmem>>, vector<8x128xf32>,
    return
  }
  func.func @transform_0(%arg0: i32) -> (i32, i32) {
    %c0_i32 = arith.constant 0 : i32
    %c0_i32_0 = arith.constant 0 : i32
    return %arg0, %c0_i32 : i32, i32
  }
  func.func @transform_1(%arg0: i32) -> (i32, i32) {
    %c0_i32 = arith.constant 0 : i32
    %c0_i32_0 = arith.constant 0 : i32
    %c0_i32_1 = arith.constant 0 : i32
    return %c0_i32, %c0_i32_0 : i32, i32
  }
  func.func @transform_2(%arg0: i32) -> (i32, i32) {
    %c0_i32 = arith.constant 0 : i32
    %c0_i32_0 = arith.constant 0 : i32
    %c0_i32_1 = arith.constant 0 : i32
    return %c0_i32, %c0_i32_0 : i32, i32
  }
  func.func @transform_3(%arg0: i32) -> (i32, i32) {
    %c0_i32 = arith.constant 0 : i32
    %c0_i32_0 = arith.constant 0 : i32
    %c0_i32_1 = arith.constant 0 : i32
    return %c0_i32, %c0_i32_0 : i32, i32
  }
  func.func @transform_4(%arg0: i32) -> (i32, i32) {
    %c0_i32 = arith.constant 0 : i32
    %c0_i32_0 = arith.constant 0 : i32
    %c0_i32_1 = arith.constant 0 : i32
    return %c0_i32, %c0_i32_0 : i32, i32
  }
  func.func @transform_5(%arg0: i32) -> (i32, i32) {
    %c0_i32 = arith.constant 0 : i32
    %c0_i32_0 = arith.constant 0 : i32
    return %arg0, %c0_i32 : i32, i32
  }
}

</mosaic_0001>

<llo_original>
// kernel: tpu_custom_call.1
$region0: #{tpu_custom_call.1}
  #allocation0 [shape = 'u32[]', space=smem, size = 0x4, offset = 0x4, fixed_abs, tag = 'smem constant byte address 0x4 - core index']
  #allocation1 [shape = 'u32[144,128]{1,0:T(1,128)}', space=vmem, size = 0x12000, scoped, tag = 'internal scratch']
  %s0 = inlined_call_operand.hbm [shape: f32[8,128], index: 0, kind: input, shape index: {}]
  %s1 = inlined_call_operand.hbm [shape: f32[128,128], index: 1, kind: input, shape index: {}]
  %s2 = inlined_call_operand.vmem [shape: f32[1,128], index: 2, kind: input, shape index: {}]
  %s3 = inlined_call_operand.hbm [shape: f32[128,128], index: 3, kind: input, shape index: {}]
  %s4 = inlined_call_operand.vmem [shape: f32[1,128], index: 4, kind: input, shape index: {}]
  %s5 = inlined_call_operand.hbm [shape: f32[8,128], index: 5, kind: output, shape index: {}]
  %s6 = sld [smem:[#allocation0]]
  $region42: #{tpu_custom_call.1} parent=0
    _
  %s8 = ssub.s32 1, %s6
  %s9 = scalar_select 0, %s8, %s6
  $region1: #{tpu_custom_call.1} parent=0
    #allocation2 [shape = 'u8[4096]{0}', space=vmem, size = 0x1000, scoped, tag = 'input window, operand 0, single buffered']
    #allocation3 [shape = 's32[1]{0}', space=sflag, size = 0x4, scoped, tag = 'scoped memory for tpu_custom_call.1']
    #allocation4 [shape = 's32[1]{0}', space=sflag, size = 0x4, scoped, tag = 'scoped memory for tpu_custom_call.1']
    #allocation5 [shape = 'u8[65536]{0}', space=vmem, size = 0x10000, scoped, tag = 'input window, operand 1, single buffered']
    #allocation6 [shape = 's32[1]{0}', space=sflag, size = 0x4, scoped, tag = 'scoped memory for tpu_custom_call.1']
    #allocation7 [shape = 'u8[65536]{0}', space=vmem, size = 0x10000, scoped, tag = 'input window, operand 3, single buffered']
    #allocation8 [shape = 'u8[4096]{0}', space=vmem, size = 0x1000, scoped, tag = 'output window, operand 0, single buffered']
    %10 = vsyncpa [#allocation3], 0
    %11 = vsyncpa [#allocation6], 0
    %12 = vsyncpa [#allocation4], 0
    // Predicated region
    $region2: #{tpu_custom_call.1} parent=1 // pred_check
      _
    $region3: #{tpu_custom_call.1} parent=1 // pred_check_branch
      %14 = sbr.rel (0) target = $region5
    $region4: #{tpu_custom_call.1} parent=1 // pred_region
      %s16 = ssub.s32 128, 128
      %17 = vsyncadd [#allocation3], %s16
      %s19 = sshll.u32 [#allocation2], 4
      %s20 = int_to_ptr.vmem [resolvable:$true] %s19
      %22 = dma.hbm_to_vmem [thread:$0]  %s0, 128, %s20, [#allocation3]
    $region5: #{tpu_custom_call.1} parent=1 // pred_fallthru
      _
    // Predicated region
    $region6: #{tpu_custom_call.1} parent=1 // pred_check
      _
    $region7: #{tpu_custom_call.1} parent=1 // pred_check_branch
      %24 = sbr.rel (0) target = $region9
    $region8: #{tpu_custom_call.1} parent=1 // pred_region
      %s26 = ssub.s32 2048, 2048
      %27 = vsyncadd [#allocation6], %s26
      %s28 = sshll.u32 [#allocation5], 4
      %s29 = int_to_ptr.vmem [resolvable:$true] %s28
      %34 = dma.hbm_to_vmem [thread:$0]  %s1, 2048, %s29, [#allocation6], 128, 128, 8
    $region9: #{tpu_custom_call.1} parent=1 // pred_fallthru
      _
    // Predicated region
    $region10: #{tpu_custom_call.1} parent=1 // pred_check
      _
    $region11: #{tpu_custom_call.1} parent=1 // pred_check_branch
      %36 = sbr.rel (0) target = $region13
    $region12: #{tpu_custom_call.1} parent=1 // pred_region
      _
    $region13: #{tpu_custom_call.1} parent=1 // pred_fallthru
      _
    // Predicated region
    $region14: #{tpu_custom_call.1} parent=1 // pred_check
      _
    $region15: #{tpu_custom_call.1} parent=1 // pred_check_branch
      %38 = sbr.rel (0) target = $region17
    $region16: #{tpu_custom_call.1} parent=1 // pred_region
      %s40 = ssub.s32 2048, 2048
      %41 = vsyncadd [#allocation6], %s40
      %s42 = sshll.u32 [#allocation7], 4
      %s43 = int_to_ptr.vmem [resolvable:$true] %s42
      %48 = dma.hbm_to_vmem [thread:$0]  %s3, 2048, %s43, [#allocation6], 128, 128, 8
    $region17: #{tpu_custom_call.1} parent=1 // pred_fallthru
      _
    // Predicated region
    $region18: #{tpu_custom_call.1} parent=1 // pred_check
      _
    $region19: #{tpu_custom_call.1} parent=1 // pred_check_branch
      %50 = sbr.rel (0) target = $region21
    $region20: #{tpu_custom_call.1} parent=1 // pred_region
      _
    $region21: #{tpu_custom_call.1} parent=1 // pred_fallthru
      _
    // Predicated region
    $region22: #{tpu_custom_call.1} parent=1 // pred_check
      _
    $region23: #{tpu_custom_call.1} parent=1 // pred_check_branch
      %52 = sbr.rel (0) target = $region25
    $region24: #{tpu_custom_call.1} parent=1 // pred_region
      %53 = dma.done [#allocation3], 128
    $region25: #{tpu_custom_call.1} parent=1 // pred_fallthru
      _
    // Predicated region
    $region26: #{tpu_custom_call.1} parent=1 // pred_check
      _
    $region27: #{tpu_custom_call.1} parent=1 // pred_check_branch
      %55 = sbr.rel (0) target = $region29
    $region28: #{tpu_custom_call.1} parent=1 // pred_region
      %56 = dma.done [#allocation6], 2048
    $region29: #{tpu_custom_call.1} parent=1 // pred_fallthru
      _
    // Predicated region
    $region30: #{tpu_custom_call.1} parent=1 // pred_check
      _
    $region31: #{tpu_custom_call.1} parent=1 // pred_check_branch
      %58 = sbr.rel (0) target = $region33
    $region32: #{tpu_custom_call.1} parent=1 // pred_region
      %59 = dma.done [#allocation6], 2048
    $region33: #{tpu_custom_call.1} parent=1 // pred_fallthru
      _
    %v60 = vld [vmem:[#allocation2] sm:$0xff]
    %v61 = vld [vmem:[#allocation5] sm:$0xff]
    %v62 = vld [vmem:[#allocation5 + $0x8] sm:$0xff]
    %v63 = vld [vmem:[#allocation5 + $0x10] sm:$0xff]
    %v64 = vld [vmem:[#allocation5 + $0x18] sm:$0xff]
    %v65 = vld [vmem:[#allocation5 + $0x20] sm:$0xff]
    %v66 = vld [vmem:[#allocation5 + $0x28] sm:$0xff]
    %v67 = vld [vmem:[#allocation5 + $0x30] sm:$0xff]
    %v68 = vld [vmem:[#allocation5 + $0x38] sm:$0xff]
    %v69 = vld [vmem:[#allocation5 + $0x40] sm:$0xff]
    %v70 = vld [vmem:[#allocation5 + $0x48] sm:$0xff]
    %v71 = vld [vmem:[#allocation5 + $0x50] sm:$0xff]
    %v72 = vld [vmem:[#allocation5 + $0x58] sm:$0xff]
    %v73 = vld [vmem:[#allocation5 + $0x60] sm:$0xff]
    %v74 = vld [vmem:[#allocation5 + $0x68] sm:$0xff]
    %v75 = vld [vmem:[#allocation5 + $0x70] sm:$0xff]
    %v76 = vld [vmem:[#allocation5 + $0x78] sm:$0xff]
    %v77 = vld [vmem:[%s2] sm:$0x1]
    %v79 = vlaneseq
    %v80 = vshrl.u32 %v79, 7
    %v81 = vsub.s32 0, %v80
    %v82 = vrot.slane %v77, %v81
    %84 = vmatprep.subr.mxu0 0.0
    %85 = vmatpush1.msra.mxu0 %v76
    %86 = vmatprep.subr.mxu0 0.0
    %87 = vmatpush1.msra.mxu0 %v75
    %88 = vmatprep.subr.mxu0 0.0
    %89 = vmatpush1.msra.mxu0 %v74
    %90 = vmatprep.subr.mxu0 0.0
    %91 = vmatpush1.msra.mxu0 %v73
    %92 = vmatprep.subr.mxu0 0.0
    %93 = vmatpush1.msra.mxu0 %v72
    %94 = vmatprep.subr.mxu0 0.0
    %95 = vmatpush1.msra.mxu0 %v71
    %96 = vmatprep.subr.mxu0 0.0
    %97 = vmatpush1.msra.mxu0 %v70
    %98 = vmatprep.subr.mxu0 0.0
    %99 = vmatpush1.msra.mxu0 %v69
    %100 = vmatprep.subr.mxu0 0.0
    %101 = vmatpush1.msra.mxu0 %v68
    %102 = vmatprep.subr.mxu0 0.0
    %103 = vmatpush1.msra.mxu0 %v67
    %104 = vmatprep.subr.mxu0 0.0
    %105 = vmatpush1.msra.mxu0 %v66
    %106 = vmatprep.subr.mxu0 0.0
    %107 = vmatpush1.msra.mxu0 %v65
    %108 = vmatprep.subr.mxu0 0.0
    %109 = vmatpush1.msra.mxu0 %v64
    %110 = vmatprep.subr.mxu0 0.0
    %111 = vmatpush1.msra.mxu0 %v63
    %112 = vmatprep.subr.mxu0 0.0
    %113 = vmatpush1.msra.mxu0 %v62
    %114 = vmatprep.subr.mxu0 0.0
    %115 = vmatpush1.msra.mxu0 %v61
    %116 = vmatprep.subr.mxu0 0.0
    %117 = vmatpush2.msra.mxu0 0.0
    %118 = vmatprep.subr.mxu0 0.0
    %119 = vmatpush2.msra.mxu0 0.0
    %120 = vmatprep.subr.mxu0 0.0
    %121 = vmatpush2.msra.mxu0 0.0
    %122 = vmatprep.subr.mxu0 0.0
    %123 = vmatpush2.msra.mxu0 0.0
    %124 = vmatprep.subr.mxu0 0.0
    %125 = vmatpush2.msra.mxu0 0.0
    %126 = vmatprep.subr.mxu0 0.0
    %127 = vmatpush2.msra.mxu0 0.0
    %128 = vmatprep.subr.mxu0 0.0
    %129 = vmatpush2.msra.mxu0 0.0
    %130 = vmatprep.subr.mxu0 0.0
    %131 = vmatpush2.msra.mxu0 0.0
    %132 = vmatprep.subr.mxu0 0.0
    %133 = vmatpush2.msra.mxu0 0.0
    %134 = vmatprep.subr.mxu0 0.0
    %135 = vmatpush2.msra.mxu0 0.0
    %136 = vmatprep.subr.mxu0 0.0
    %137 = vmatpush2.msra.mxu0 0.0
    %138 = vmatprep.subr.mxu0 0.0
    %139 = vmatpush2.msra.mxu0 0.0
    %140 = vmatprep.subr.mxu0 0.0
    %141 = vmatpush2.msra.mxu0 0.0
    %142 = vmatprep.subr.mxu0 0.0
    %143 = vmatpush2.msra.mxu0 0.0
    %144 = vmatprep.subr.mxu0 0.0
    %145 = vmatpush2.msra.mxu0 0.0
    %146 = vmatprep.subr.mxu0 0.0
    %147 = vmatpush2.msra.mxu0 0.0
    %148 = vmatprep.mubr.f32.mxu0 0.0
    %149 = vmatmul.mubr.f32.gmra.mxu0 %v60
    %v150 = vpop.f32.mrf.mxu0
    %v151 = vadd.f32 %v82, %v150
    %v152 = vpop.f32.mrf.mxu0
    %153 = vdwg.mxu0
    %v154 = vtanh.pop %v151
    %v155 = vld [vmem:[#allocation7] sm:$0xff]
    %v156 = vld [vmem:[#allocation7 + $0x8] sm:$0xff]
    %v157 = vld [vmem:[#allocation7 + $0x10] sm:$0xff]
    %v158 = vld [vmem:[#allocation7 + $0x18] sm:$0xff]
    %v159 = vld [vmem:[#allocation7 + $0x20] sm:$0xff]
    %v160 = vld [vmem:[#allocation7 + $0x28] sm:$0xff]
    %v161 = vld [vmem:[#allocation7 + $0x30] sm:$0xff]
    %v162 = vld [vmem:[#allocation7 + $0x38] sm:$0xff]
    %v163 = vld [vmem:[#allocation7 + $0x40] sm:$0xff]
    %v164 = vld [vmem:[#allocation7 + $0x48] sm:$0xff]
    %v165 = vld [vmem:[#allocation7 + $0x50] sm:$0xff]
    %v166 = vld [vmem:[#allocation7 + $0x58] sm:$0xff]
    %v167 = vld [vmem:[#allocation7 + $0x60] sm:$0xff]
    %v168 = vld [vmem:[#allocation7 + $0x68] sm:$0xff]
    %v169 = vld [vmem:[#allocation7 + $0x70] sm:$0xff]
    %v170 = vld [vmem:[#allocation7 + $0x78] sm:$0xff]
    %v171 = vld [vmem:[%s4] sm:$0x1]
    %v173 = vlaneseq
    %v174 = vshrl.u32 %v173, 7
    %v175 = vsub.s32 0, %v174
    %v176 = vrot.slane %v171, %v175
    %178 = vmatprep.subr.mxu0 0.0
    %179 = vmatpush1.msra.mxu0 %v170
    %180 = vmatprep.subr.mxu0 0.0
    %181 = vmatpush1.msra.mxu0 %v169
    %182 = vmatprep.subr.mxu0 0.0
    %183 = vmatpush1.msra.mxu0 %v168
    %184 = vmatprep.subr.mxu0 0.0
    %185 = vmatpush1.msra.mxu0 %v167
    %186 = vmatprep.subr.mxu0 0.0
    %187 = vmatpush1.msra.mxu0 %v166
    %188 = vmatprep.subr.mxu0 0.0
    %189 = vmatpush1.msra.mxu0 %v165
    %190 = vmatprep.subr.mxu0 0.0
    %191 = vmatpush1.msra.mxu0 %v164
    %192 = vmatprep.subr.mxu0 0.0
    %193 = vmatpush1.msra.mxu0 %v163
    %194 = vmatprep.subr.mxu0 0.0
    %195 = vmatpush1.msra.mxu0 %v162
    %196 = vmatprep.subr.mxu0 0.0
    %197 = vmatpush1.msra.mxu0 %v161
    %198 = vmatprep.subr.mxu0 0.0
    %199 = vmatpush1.msra.mxu0 %v160
    %200 = vmatprep.subr.mxu0 0.0
    %201 = vmatpush1.msra.mxu0 %v159
    %202 = vmatprep.subr.mxu0 0.0
    %203 = vmatpush1.msra.mxu0 %v158
    %204 = vmatprep.subr.mxu0 0.0
    %205 = vmatpush1.msra.mxu0 %v157
    %206 = vmatprep.subr.mxu0 0.0
    %207 = vmatpush1.msra.mxu0 %v156
    %208 = vmatprep.subr.mxu0 0.0
    %209 = vmatpush1.msra.mxu0 %v155
    %210 = vmatprep.subr.mxu0 0.0
    %211 = vmatpush2.msra.mxu0 0.0
    %212 = vmatprep.subr.mxu0 0.0
    %213 = vmatpush2.msra.mxu0 0.0
    %214 = vmatprep.subr.mxu0 0.0
    %215 = vmatpush2.msra.mxu0 0.0
    %216 = vmatprep.subr.mxu0 0.0
    %217 = vmatpush2.msra.mxu0 0.0
    %218 = vmatprep.subr.mxu0 0.0
    %219 = vmatpush2.msra.mxu0 0.0
    %220 = vmatprep.subr.mxu0 0.0
    %221 = vmatpush2.msra.mxu0 0.0
    %222 = vmatprep.subr.mxu0 0.0
    %223 = vmatpush2.msra.mxu0 0.0
    %224 = vmatprep.subr.mxu0 0.0
    %225 = vmatpush2.msra.mxu0 0.0
    %226 = vmatprep.subr.mxu0 0.0
    %227 = vmatpush2.msra.mxu0 0.0
    %228 = vmatprep.subr.mxu0 0.0
    %229 = vmatpush2.msra.mxu0 0.0
    %230 = vmatprep.subr.mxu0 0.0
    %231 = vmatpush2.msra.mxu0 0.0
    %232 = vmatprep.subr.mxu0 0.0
    %233 = vmatpush2.msra.mxu0 0.0
    %234 = vmatprep.subr.mxu0 0.0
    %235 = vmatpush2.msra.mxu0 0.0
    %236 = vmatprep.subr.mxu0 0.0
    %237 = vmatpush2.msra.mxu0 0.0
    %238 = vmatprep.subr.mxu0 0.0
    %239 = vmatpush2.msra.mxu0 0.0
    %240 = vmatprep.subr.mxu0 0.0
    %241 = vmatpush2.msra.mxu0 0.0
    %242 = vmatprep.mubr.f32.mxu0 0.0
    %243 = vmatmul.mubr.f32.gmra.mxu0 %v154
    %v244 = vpop.f32.mrf.mxu0
    %v245 = vadd.f32 %v176, %v244
    %v246 = vpop.f32.mrf.mxu0
    %247 = vdwg.mxu0
    %248 = vst [vmem:[#allocation8] sm:$0xff] %v245
    // Predicated region
    $region34: #{tpu_custom_call.1} parent=1 // pred_check
      _
    $region35: #{tpu_custom_call.1} parent=1 // pred_check_branch
      %250 = sbr.rel (0) target = $region37
    $region36: #{tpu_custom_call.1} parent=1 // pred_region
      %s252 = ssub.s32 128, 128
      %253 = vsyncadd [#allocation4], %s252
      %s255 = sshll.u32 [#allocation8], 4
      %s256 = int_to_ptr.vmem [resolvable:$true] %s255
      %258 = dma.vmem_to_hbm [thread:$0]  %s256, 128, %s5, [#allocation4]
    $region37: #{tpu_custom_call.1} parent=1 // pred_fallthru
      _
    // Predicated region
    $region38: #{tpu_custom_call.1} parent=1 // pred_check
      _
    $region39: #{tpu_custom_call.1} parent=1 // pred_check_branch
      %260 = sbr.rel (0) target = $region41
    $region40: #{tpu_custom_call.1} parent=1 // pred_region
      %261 = dma.done [#allocation4], 128
    $region41: #{tpu_custom_call.1} parent=1 // pred_fallthru
      _
    %262 = vsyncpa [#allocation3], 1
    %263 = vsyncpa [#allocation6], 1
    %264 = vsyncpa [#allocation4], 1

</llo_original>
